<compile_context>
chip_gen: v7x
topology: tpu7x:2x2x1
jax: 0.10.0
libtpu: 0.0.40
codegen_flags: <defaults>
</compile_context>

<pallas_src>
import functools

import jax
import jax.numpy as jnp
from jax import lax
from jax.experimental import pallas as pl
from jax.experimental.pallas import tpu as pltpu

# ---- small, deterministic model configuration -------------------------------
COEFF_NC = 16       # coeff_nc (3DMM coefficient channels)
DESCRIPTOR_NC = 32  # descriptor_nc
LAYER = 2           # MappingNet dilated residual layers
SEQ = 32            # temporal window of driving_source (must be >= 7 + 6*LAYER)
NEG_SLOPE = 0.1     # LeakyReLU(0.1)


# ------------------------------ Pallas kernel --------------------------------
def _mapping_net_kernel(x_ref, wf_ref, bf_ref, we_ref, be_ref, pool_ref,
                        out_ref, *, layer):
    """Fused MappingNet forward over the whole batch (single grid step).

    x_ref   : (M, C_in)             flattened+padded coefficients, row b*T + t
    wf_ref  : (7*C_in, C_d)         'first' conv weight, tap-major packed
    bf_ref  : (1, C_d)              'first' conv bias
    we_ref  : (layer, 3*C_d, C_d)   encoder conv weights, tap-major packed
    be_ref  : (layer, 1, C_d)       encoder conv biases
    pool_ref: (B, M - 6 - 6*layer)  per-batch mean-pooling / masking matrix
    out_ref : (B, C_d)              pooled descriptor (single dense store)
    """
    x = x_ref[...]                                   # (M, C_in)
    m = x.shape[0] - 6                               # rows after the k=7 conv

    # first: Conv1d(k=7) as one in-kernel im2col + MXU matmul (K = 7*C_in).
    x_cat = jnp.concatenate([x[k:k + m, :] for k in range(7)], axis=-1)
    out = jnp.dot(x_cat, wf_ref[...], preferred_element_type=jnp.float32)
    out = out + bf_ref[...]                          # trailing bias add

    # encoder_i: LeakyReLU(0.1) -> Conv1d(k=3, dilation=3) ; residual out[3:-3]
    for i in range(layer):
        h = jnp.where(out > 0, out, NEG_SLOPE * out)
        m = m - 6
        h_cat = jnp.concatenate(
            [h[0:m, :], h[3:3 + m, :], h[6:6 + m, :]], axis=-1)
        conv = jnp.dot(h_cat, we_ref[i], preferred_element_type=jnp.float32)
        out = conv + be_ref[i] + out[3:3 + m, :]

    # pooling: AdaptiveAvgPool1d(1) == per-batch masked mean, as one matmul
    # (also zeroes padded rows and rows whose window crossed a batch boundary).
    out_ref[...] = jnp.dot(pool_ref[...], out,
                           preferred_element_type=jnp.float32)


@jax.jit
def mapping_net_pallas(driving_source, params):
    """driving_source: (B, coeff_nc, T) float32 (PyTorch NCW layout).
    Returns descriptor: (B, descriptor_nc, 1), matching MappingNet.forward."""
    wf, bf, we, be = params
    b, c_in, t = driving_source.shape
    c_d = wf.shape[2]
    t1 = t - 6                          # temporal length after the k=7 conv
    t_final = t1 - 6 * LAYER            # valid time steps per batch at the end
    assert t_final >= 1, "SEQ too short for 7 + 6*LAYER receptive field"

    # layout only: NCW -> (B*T, C_in); pad rows to a multiple of 8 sublanes so
    # every in-kernel operand starts on a full (8, lane) tile.
    x = jnp.transpose(driving_source, (0, 2, 1)).reshape(b * t, c_in)
    m_pad = pl.cdiv(b * t, 8) * 8
    if m_pad != b * t:
        x = jnp.pad(x, ((0, m_pad - b * t), (0, 0)))

    wf2 = wf.reshape(7 * c_in, c_d)                   # (7*C_in, C_d) tap-major
    we2 = we.reshape(LAYER, 3 * c_d, c_d)             # (LAYER, 3*C_d, C_d)

    # Pooling matrix: batch b's valid rows live at flat indices
    # [b*T, b*T + t_final) after all convs; average exactly those.
    m_final = m_pad - 6 - 6 * LAYER
    cols = jnp.arange(m_final)[None, :]
    start = (jnp.arange(b) * t)[:, None]
    pool = (((cols >= start) & (cols < start + t_final))
            .astype(jnp.float32) / float(t_final))   # (B, m_final)

    kernel = functools.partial(_mapping_net_kernel, layer=LAYER)
    out = pl.pallas_call(
        kernel,
        out_shape=jax.ShapeDtypeStruct((b, c_d), jnp.float32),
        grid_spec=pl.GridSpec(
            grid=(1,),                      # single grid step: batch is in M
            in_specs=[
                pl.BlockSpec((m_pad, c_in), lambda i: (0, 0)),
                pl.BlockSpec((7 * c_in, c_d), lambda i: (0, 0)),
                pl.BlockSpec((1, c_d), lambda i: (0, 0)),
                pl.BlockSpec((LAYER, 3 * c_d, c_d), lambda i: (0, 0, 0)),
                pl.BlockSpec((LAYER, 1, c_d), lambda i: (0, 0, 0)),
                pl.BlockSpec((b, m_final), lambda i: (0, 0)),
            ],
            out_specs=pl.BlockSpec((b, c_d), lambda i: (0, 0)),
        ),
        compiler_params=pltpu.CompilerParams(
            dimension_semantics=("arbitrary",)),
    )(x, wf2, bf, we2, be, pool)
    return out[:, :, None]                            # (B, C_d, 1)


# -------------------------- deterministic parameters -------------------------
def init_mapping_net_params(key):
    k0, k1, k2, k3 = jax.random.split(key, 4)
    scale_f = 1.0 / jnp.sqrt(COEFF_NC * 7.0)
    scale_e = 1.0 / jnp.sqrt(DESCRIPTOR_NC * 3.0)
    wf = scale_f * jax.random.normal(k0, (7, COEFF_NC, DESCRIPTOR_NC), jnp.float32)
    bf = scale_f * jax.random.normal(k1, (1, DESCRIPTOR_NC), jnp.float32)
    we = scale_e * jax.random.normal(
        k2, (LAYER, 3, DESCRIPTOR_NC, DESCRIPTOR_NC), jnp.float32)
    be = scale_e * jax.random.normal(k3, (LAYER, 1, DESCRIPTOR_NC), jnp.float32)
    return wf, bf, we, be


# ------------------------------ pure-JAX reference ---------------------------
def mapping_net_reference(driving_source, params):
    wf, bf, we, be = params
    dn = ("NCH", "OIH", "NCH")
    w_first = jnp.transpose(wf, (2, 1, 0))            # (C_out, C_in, K)
    out = lax.conv_general_dilated(driving_source, w_first, (1,), "VALID",
                                   dimension_numbers=dn)
    out = out + bf.reshape(1, -1, 1)
    for i in range(LAYER):
        h = jnp.where(out > 0, out, NEG_SLOPE * out)
        wi = jnp.transpose(we[i], (2, 1, 0))
        conv = lax.conv_general_dilated(h, wi, (1,), "VALID",
                                        rhs_dilation=(3,),
                                        dimension_numbers=dn)
        conv = conv + be[i].reshape(1, -1, 1)
        out = conv + out[:, :, 3:-3]
    return jnp.mean(out, axis=2, keepdims=True)


# ------------------------------- FaceGenerator -------------------------------
class FaceGenerator:
    """Mirrors FaceGenerator.forward control flow.  The descriptor (MappingNet)
    is computed with the fused Pallas kernel above."""

    def __init__(self, key):
        self.mapping_params = init_mapping_net_params(key)

    def forward(self, input_image, driving_source, stage=None):
        descriptor = mapping_net_pallas(driving_source, self.mapping_params)
        output = {"descriptor": descriptor}
        # TODO(synk): WarpingNet (ADAINHourglass + flow_util warp) and
        # EditingNet (FineEncoder/FineDecoder/LayerNorm2d) class definitions
        # are not provided in the reference module, so their forward passes
        # ('flow_field', 'warp_image', 'fake_image') are not reproduced here.
        return output


# ------------------------------------ main -----------------------------------
if __name__ == "__main__":
    key = jax.random.PRNGKey(0)
    k_img, k_drv, k_par = jax.random.split(key, 3)

    B = 2
    input_image = jax.random.normal(k_img, (B, 3, 16, 16), jnp.float32)   # NCHW
    driving_source = jax.random.normal(k_drv, (B, COEFF_NC, SEQ), jnp.float32)

    gen = FaceGenerator(k_par)
    out = gen.forward(input_image, driving_source, stage="warp")
    descriptor = jax.block_until_ready(out["descriptor"])

    # correctness check against a pure-JAX (lax.conv) reference
    ref = jax.block_until_ready(
        mapping_net_reference(driving_source, gen.mapping_params))
    assert descriptor.shape == (B, DESCRIPTOR_NC, 1), descriptor.shape
    assert jnp.allclose(descriptor, ref, atol=1e-4, rtol=1e-4), (
        float(jnp.max(jnp.abs(descriptor - ref))))

    print("KERNEL_OK")
</pallas_src>

<mosaic_0001>
module attributes {stable_mosaic.version = 11 : i64} {
  func.func @_mapping_net_kernel(%arg0: i32, %arg1: memref<64x16xf32, #tpu.memory_space<vmem>>, %arg2: memref<112x32xf32, #tpu.memory_space<vmem>>, %arg3: memref<1x32xf32, #tpu.memory_space<vmem>>, %arg4: memref<2x96x32xf32, #tpu.memory_space<vmem>>, %arg5: memref<2x1x32xf32, #tpu.memory_space<vmem>>, %arg6: memref<2x46xf32, #tpu.memory_space<vmem>>, %arg7: memref<2x32xf32, #tpu.memory_space<vmem>>) attributes {dimension_semantics = [#tpu.dimension_semantics<arbitrary>], iteration_bounds = array<i64: 1>, scalar_prefetch = 0 : i64, scratch_operands = 0 : i64, tpu.core_type = #tpu.core_type<tc>, window_params = [{pipeline_mode = #tpu.pipeline_mode<synchronous>, transform_indices = @transform_0, window_bounds = array<i64: 64, 16>}, {pipeline_mode = #tpu.pipeline_mode<synchronous>, transform_indices = @transform_1, window_bounds = array<i64: 112, 32>}, {pipeline_mode = #tpu.pipeline_mode<synchronous>, transform_indices = @transform_2, window_bounds = array<i64: 1, 32>}, {pipeline_mode = #tpu.pipeline_mode<synchronous>, transform_indices = @transform_3, window_bounds = array<i64: 2, 96, 32>}, {pipeline_mode = #tpu.pipeline_mode<synchronous>, transform_indices = @transform_4, window_bounds = array<i64: 2, 1, 32>}, {pipeline_mode = #tpu.pipeline_mode<synchronous>, transform_indices = @transform_5, window_bounds = array<i64: 2, 46>}, {pipeline_mode = #tpu.pipeline_mode<synchronous>, transform_indices = @transform_6, window_bounds = array<i64: 2, 32>}]} {
    %c0 = arith.constant 0 : index
    %c0_0 = arith.constant 0 : index
    %0 = vector.load %arg1[%c0, %c0_0] : memref<64x16xf32, #tpu.memory_space<vmem>>, vector<64x16xf32>
    %1 = vector.extract_strided_slice %0 {offsets = [0, 0], sizes = [58, 16], strides = [1, 1]} : vector<64x16xf32> to vector<58x16xf32>
    %2 = vector.extract_strided_slice %0 {offsets = [1, 0], sizes = [58, 16], strides = [1, 1]} : vector<64x16xf32> to vector<58x16xf32>
    %3 = vector.extract_strided_slice %0 {offsets = [2, 0], sizes = [58, 16], strides = [1, 1]} : vector<64x16xf32> to vector<58x16xf32>
    %4 = vector.extract_strided_slice %0 {offsets = [3, 0], sizes = [58, 16], strides = [1, 1]} : vector<64x16xf32> to vector<58x16xf32>
    %5 = vector.extract_strided_slice %0 {offsets = [4, 0], sizes = [58, 16], strides = [1, 1]} : vector<64x16xf32> to vector<58x16xf32>
    %6 = vector.extract_strided_slice %0 {offsets = [5, 0], sizes = [58, 16], strides = [1, 1]} : vector<64x16xf32> to vector<58x16xf32>
    %7 = vector.extract_strided_slice %0 {offsets = [6, 0], sizes = [58, 16], strides = [1, 1]} : vector<64x16xf32> to vector<58x16xf32>
    %8 = tpu.concatenate %1, %2, %3, %4, %5, %6, %7 in 1 : vector<58x16xf32>, vector<58x16xf32>, vector<58x16xf32>, vector<58x16xf32>, vector<58x16xf32>, vector<58x16xf32>, vector<58x16xf32> -> vector<58x112xf32>
    %c0_1 = arith.constant 0 : index
    %c0_2 = arith.constant 0 : index
    %9 = vector.load %arg2[%c0_1, %c0_2] : memref<112x32xf32, #tpu.memory_space<vmem>>, vector<112x32xf32>
    %cst = arith.constant dense<0.000000e+00> : vector<58x32xf32>
    %10 = tpu.matmul %8, %9, %cst {dimension_numbers = #tpu.dot_dimension_numbers<[1], [0], [0], [1], [0, 0, 1, 1], [], []>} : vector<58x112xf32>, vector<112x32xf32>, vector<58x32xf32> -> vector<58x32xf32>
    %c0_3 = arith.constant 0 : index
    %c0_4 = arith.constant 0 : index
    %11 = vector.load %arg3[%c0_3, %c0_4] : memref<1x32xf32, #tpu.memory_space<vmem>>, vector<1x32xf32>
    %12 = vector.broadcast %11 : vector<1x32xf32> to vector<58x32xf32>
    %13 = arith.addf %10, %12 : vector<58x32xf32>
    %cst_5 = arith.constant 0.000000e+00 : f32
    %14 = vector.broadcast %cst_5 : f32 to vector<58x32xf32>
    %15 = arith.cmpf ogt, %13, %14 : vector<58x32xf32>
    %cst_6 = arith.constant 1.000000e-01 : f32
    %16 = vector.broadcast %cst_6 : f32 to vector<58x32xf32>
    %17 = arith.mulf %16, %13 : vector<58x32xf32>
    %18 = arith.select %15, %13, %17 : vector<58x32xi1>, vector<58x32xf32>
    %19 = vector.extract_strided_slice %18 {offsets = [0, 0], sizes = [52, 32], strides = [1, 1]} : vector<58x32xf32> to vector<52x32xf32>
    %20 = vector.extract_strided_slice %18 {offsets = [3, 0], sizes = [52, 32], strides = [1, 1]} : vector<58x32xf32> to vector<52x32xf32>
    %21 = vector.extract_strided_slice %18 {offsets = [6, 0], sizes = [52, 32], strides = [1, 1]} : vector<58x32xf32> to vector<52x32xf32>
    %22 = tpu.concatenate %19, %20, %21 in 1 : vector<52x32xf32>, vector<52x32xf32>, vector<52x32xf32> -> vector<52x96xf32>
    %c0_7 = arith.constant 0 : index
    %c0_8 = arith.constant 0 : index
    %c0_9 = arith.constant 0 : index
    %23 = vector.load %arg4[%c0_7, %c0_8, %c0_9] : memref<2x96x32xf32, #tpu.memory_space<vmem>>, vector<1x96x32xf32>
    %24 = vector.shape_cast %23 : vector<1x96x32xf32> to vector<96x32xf32>
    %cst_10 = arith.constant dense<0.000000e+00> : vector<52x32xf32>
    %25 = tpu.matmul %22, %24, %cst_10 {dimension_numbers = #tpu.dot_dimension_numbers<[1], [0], [0], [1], [0, 0, 1, 1], [], []>} : vector<52x96xf32>, vector<96x32xf32>, vector<52x32xf32> -> vector<52x32xf32>
    %c0_11 = arith.constant 0 : index
    %c0_12 = arith.constant 0 : index
    %c0_13 = arith.constant 0 : index
    %26 = vector.load %arg5[%c0_11, %c0_12, %c0_13] : memref<2x1x32xf32, #tpu.memory_space<vmem>>, vector<1x1x32xf32>
    %27 = vector.shape_cast %26 : vector<1x1x32xf32> to vector<1x32xf32>
    %28 = vector.broadcast %27 : vector<1x32xf32> to vector<52x32xf32>
    %29 = arith.addf %25, %28 : vector<52x32xf32>
    %30 = vector.extract_strided_slice %13 {offsets = [3, 0], sizes = [52, 32], strides = [1, 1]} : vector<58x32xf32> to vector<52x32xf32>
    %31 = arith.addf %29, %30 : vector<52x32xf32>
    %cst_14 = arith.constant 0.000000e+00 : f32
    %32 = vector.broadcast %cst_14 : f32 to vector<52x32xf32>
    %33 = arith.cmpf ogt, %31, %32 : vector<52x32xf32>
    %cst_15 = arith.constant 1.000000e-01 : f32
    %34 = vector.broadcast %cst_15 : f32 to vector<52x32xf32>
    %35 = arith.mulf %34, %31 : vector<52x32xf32>
    %36 = arith.select %33, %31, %35 : vector<52x32xi1>, vector<52x32xf32>
    %37 = vector.extract_strided_slice %36 {offsets = [0, 0], sizes = [46, 32], strides = [1, 1]} : vector<52x32xf32> to vector<46x32xf32>
    %38 = vector.extract_strided_slice %36 {offsets = [3, 0], sizes = [46, 32], strides = [1, 1]} : vector<52x32xf32> to vector<46x32xf32>
    %39 = vector.extract_strided_slice %36 {offsets = [6, 0], sizes = [46, 32], strides = [1, 1]} : vector<52x32xf32> to vector<46x32xf32>
    %40 = tpu.concatenate %37, %38, %39 in 1 : vector<46x32xf32>, vector<46x32xf32>, vector<46x32xf32> -> vector<46x96xf32>
    %c1 = arith.constant 1 : index
    %c0_16 = arith.constant 0 : index
    %c0_17 = arith.constant 0 : index
    %41 = vector.load %arg4[%c1, %c0_16, %c0_17] : memref<2x96x32xf32, #tpu.memory_space<vmem>>, vector<1x96x32xf32>
    %42 = vector.shape_cast %41 : vector<1x96x32xf32> to vector<96x32xf32>
    %cst_18 = arith.constant dense<0.000000e+00> : vector<46x32xf32>
    %43 = tpu.matmul %40, %42, %cst_18 {dimension_numbers = #tpu.dot_dimension_numbers<[1], [0], [0], [1], [0, 0, 1, 1], [], []>} : vector<46x96xf32>, vector<96x32xf32>, vector<46x32xf32> -> vector<46x32xf32>
    %c1_19 = arith.constant 1 : index
    %c0_20 = arith.constant 0 : index
    %c0_21 = arith.constant 0 : index
    %44 = vector.load %arg5[%c1_19, %c0_20, %c0_21] : memref<2x1x32xf32, #tpu.memory_space<vmem>>, vector<1x1x32xf32>
    %45 = vector.shape_cast %44 : vector<1x1x32xf32> to vector<1x32xf32>
    %46 = vector.broadcast %45 : vector<1x32xf32> to vector<46x32xf32>
    %47 = arith.addf %43, %46 : vector<46x32xf32>
    %48 = vector.extract_strided_slice %31 {offsets = [3, 0], sizes = [46, 32], strides = [1, 1]} : vector<52x32xf32> to vector<46x32xf32>
    %49 = arith.addf %47, %48 : vector<46x32xf32>
    %c0_22 = arith.constant 0 : index
    %c0_23 = arith.constant 0 : index
    %50 = vector.load %arg6[%c0_22, %c0_23] : memref<2x46xf32, #tpu.memory_space<vmem>>, vector<2x46xf32>
    %cst_24 = arith.constant dense<0.000000e+00> : vector<2x32xf32>
    %51 = tpu.matmul %50, %49, %cst_24 {dimension_numbers = #tpu.dot_dimension_numbers<[1], [0], [0], [1], [0, 0, 1, 1], [], []>} : vector<2x46xf32>, vector<46x32xf32>, vector<2x32xf32> -> vector<2x32xf32>
    %c0_25 = arith.constant 0 : index
    %c0_26 = arith.constant 0 : index
    %52 = vector.load %arg7[%c0_25, %c0_26] : memref<2x32xf32, #tpu.memory_space<vmem>>, vector<2x32xf32>
    tpu.vector_store %arg7[%c0_25, %c0_26], %51 {strides = array<i32>} : memref<2x32xf32, #tpu.memory_space<vmem>>, vector<2x32xf32>,
    return
  }
  func.func @transform_0(%arg0: i32) -> (i32, i32) {
    %c0_i32 = arith.constant 0 : i32
    %c0_i32_0 = arith.constant 0 : i32
    %c0_i32_1 = arith.constant 0 : i32
    return %c0_i32, %c0_i32_0 : i32, i32
  }
  func.func @transform_1(%arg0: i32) -> (i32, i32) {
    %c0_i32 = arith.constant 0 : i32
    %c0_i32_0 = arith.constant 0 : i32
    %c0_i32_1 = arith.constant 0 : i32
    return %c0_i32, %c0_i32_0 : i32, i32
  }
  func.func @transform_2(%arg0: i32) -> (i32, i32) {
    %c0_i32 = arith.constant 0 : i32
    %c0_i32_0 = arith.constant 0 : i32
    %c0_i32_1 = arith.constant 0 : i32
    return %c0_i32, %c0_i32_0 : i32, i32
  }
  func.func @transform_3(%arg0: i32) -> (i32, i32, i32) {
    %c0_i32 = arith.constant 0 : i32
    %c0_i32_0 = arith.constant 0 : i32
    %c0_i32_1 = arith.constant 0 : i32
    %c0_i32_2 = arith.constant 0 : i32
    return %c0_i32, %c0_i32_0, %c0_i32_1 : i32, i32, i32
  }
  func.func @transform_4(%arg0: i32) -> (i32, i32, i32) {
    %c0_i32 = arith.constant 0 : i32
    %c0_i32_0 = arith.constant 0 : i32
    %c0_i32_1 = arith.constant 0 : i32
    %c0_i32_2 = arith.constant 0 : i32
    return %c0_i32, %c0_i32_0, %c0_i32_1 : i32, i32, i32
  }
  func.func @transform_5(%arg0: i32) -> (i32, i32) {
    %c0_i32 = arith.constant 0 : i32
    %c0_i32_0 = arith.constant 0 : i32
    %c0_i32_1 = arith.constant 0 : i32
    return %c0_i32, %c0_i32_0 : i32, i32
  }
  func.func @transform_6(%arg0: i32) -> (i32, i32) {
    %c0_i32 = arith.constant 0 : i32
    %c0_i32_0 = arith.constant 0 : i32
    %c0_i32_1 = arith.constant 0 : i32
    return %c0_i32, %c0_i32_0 : i32, i32
  }
}

</mosaic_0001>

<llo_original>
// kernel: mapping_net_pallas.1
$region0: #{mapping_net_pallas.1}
  #allocation0 [shape = 'u32[]', space=smem, size = 0x4, offset = 0x4, fixed_abs, tag = 'smem constant byte address 0x4 - core index']
  #allocation1 [shape = 'u32[144,128]{1,0:T(1,128)}', space=vmem, size = 0x12000, scoped, tag = 'internal scratch']
  %s0 = inlined_call_operand.vmem [shape: f32[64,16], index: 0, kind: input, shape index: {}]
  %s1 = inlined_call_operand.vmem [shape: f32[112,32], index: 1, kind: input, shape index: {}]
  %s2 = inlined_call_operand.vmem [shape: f32[1,32], index: 2, kind: input, shape index: {}]
  %s3 = inlined_call_operand.hbm [shape: f32[2,96,32], index: 3, kind: input, shape index: {}]
  %s4 = inlined_call_operand.vmem [shape: f32[2,1,32], index: 4, kind: input, shape index: {}]
  %s5 = inlined_call_operand.vmem [shape: f32[2,46], index: 5, kind: input, shape index: {}]
  %s6 = inlined_call_operand.hbm [shape: f32[2,32], index: 6, kind: output, shape index: {}]
  %s7 = sld [smem:[#allocation0]]
  $region38: #{mapping_net_pallas.1} parent=0
    _
  %s9 = ssub.s32 1, %s7
  %s10 = scalar_select 0, %s9, %s7
  $region1: #{mapping_net_pallas.1} parent=0
    #allocation2 [shape = 'u8[98304]{0}', space=vmem, size = 0x18000, scoped, tag = 'input window, operand 3, single buffered']
    #allocation3 [shape = 's32[1]{0}', space=sflag, size = 0x4, scoped, tag = 'scoped memory for mapping_net_pallas.1']
    #allocation4 [shape = 's32[1]{0}', space=sflag, size = 0x4, scoped, tag = 'scoped memory for mapping_net_pallas.1']
    #allocation5 [shape = 'u8[1024]{0}', space=vmem, size = 0x400, scoped, tag = 'output window, operand 0, single buffered']
    %11 = vsyncpa [#allocation3], 0
    %12 = vsyncpa [#allocation4], 0
    // Predicated region
    $region2: #{mapping_net_pallas.1} parent=1 // pred_check
      _
    $region3: #{mapping_net_pallas.1} parent=1 // pred_check_branch
      %14 = sbr.rel (0) target = $region5
    $region4: #{mapping_net_pallas.1} parent=1 // pred_region
      _
    $region5: #{mapping_net_pallas.1} parent=1 // pred_fallthru
      _
    // Predicated region
    $region6: #{mapping_net_pallas.1} parent=1 // pred_check
      _
    $region7: #{mapping_net_pallas.1} parent=1 // pred_check_branch
      %16 = sbr.rel (0) target = $region9
    $region8: #{mapping_net_pallas.1} parent=1 // pred_region
      _
    $region9: #{mapping_net_pallas.1} parent=1 // pred_fallthru
      _
    // Predicated region
    $region10: #{mapping_net_pallas.1} parent=1 // pred_check
      _
    $region11: #{mapping_net_pallas.1} parent=1 // pred_check_branch
      %18 = sbr.rel (0) target = $region13
    $region12: #{mapping_net_pallas.1} parent=1 // pred_region
      _
    $region13: #{mapping_net_pallas.1} parent=1 // pred_fallthru
      _
    // Predicated region
    $region14: #{mapping_net_pallas.1} parent=1 // pred_check
      _
    $region15: #{mapping_net_pallas.1} parent=1 // pred_check_branch
      %20 = sbr.rel (0) target = $region17
    $region16: #{mapping_net_pallas.1} parent=1 // pred_region
      %s22 = ssub.s32 3072, 3072
      %23 = vsyncadd [#allocation3], %s22
      %s24 = sshll.u32 [#allocation2], 4
      %s25 = int_to_ptr.vmem [resolvable:$true] %s24
      %30 = dma.hbm_to_vmem [thread:$0]  %s3, 3072, %s25, [#allocation3], 128, 128, 8
    $region17: #{mapping_net_pallas.1} parent=1 // pred_fallthru
      _
    // Predicated region
    $region18: #{mapping_net_pallas.1} parent=1 // pred_check
      _
    $region19: #{mapping_net_pallas.1} parent=1 // pred_check_branch
      %32 = sbr.rel (0) target = $region21
    $region20: #{mapping_net_pallas.1} parent=1 // pred_region
      _
    $region21: #{mapping_net_pallas.1} parent=1 // pred_fallthru
      _
    // Predicated region
    $region22: #{mapping_net_pallas.1} parent=1 // pred_check
      _
    $region23: #{mapping_net_pallas.1} parent=1 // pred_check_branch
      %34 = sbr.rel (0) target = $region25
    $region24: #{mapping_net_pallas.1} parent=1 // pred_region
      _
    $region25: #{mapping_net_pallas.1} parent=1 // pred_fallthru
      _
    // Predicated region
    $region26: #{mapping_net_pallas.1} parent=1 // pred_check
      _
    $region27: #{mapping_net_pallas.1} parent=1 // pred_check_branch
      %36 = sbr.rel (0) target = $region29
    $region28: #{mapping_net_pallas.1} parent=1 // pred_region
      %37 = dma.done [#allocation3], 3072
    $region29: #{mapping_net_pallas.1} parent=1 // pred_fallthru
      _
    %v38 = vld [vmem:[%s0] sm:$0xff]
    %v39 = vld [vmem:[%s0 + $0x8] sm:$0xff]
    %v40 = vld [vmem:[%s0 + $0x10] sm:$0xff]
    %v41 = vld [vmem:[%s0 + $0x18] sm:$0xff]
    %v42 = vld [vmem:[%s0 + $0x20] sm:$0xff]
    %v43 = vld [vmem:[%s0 + $0x28] sm:$0xff]
    %v44 = vld [vmem:[%s0 + $0x30] sm:$0xff]
    %v45 = vld [vmem:[%s0 + $0x38] sm:$0xff]
    %vm54 = vcmask 1046528
    %v55 = vrot.slane %v38, 1
    %v56 = vrot.slane %v39, 1
    %v57 = vsel %vm54, %v55, %v56
    %v58 = vrot.slane %v40, 1
    %v59 = vsel %vm54, %v56, %v58
    %v60 = vrot.slane %v41, 1
    %v61 = vsel %vm54, %v58, %v60
    %v62 = vrot.slane %v42, 1
    %v63 = vsel %vm54, %v60, %v62
    %v64 = vrot.slane %v43, 1
    %v65 = vsel %vm54, %v62, %v64
    %v66 = vrot.slane %v44, 1
    %v67 = vsel %vm54, %v64, %v66
    %v68 = vrot.slane %v45, 1
    %v69 = vsel %vm54, %v66, %v68
    %70 = vrot.lane.b32.xlu0 %v57, 16
    %v71 = vpop.permute.xlu0 %70
    %72 = vrot.lane.b32.xlu0 %v59, 16
    %v73 = vpop.permute.xlu0 %72
    %74 = vrot.lane.b32.xlu0 %v61, 16
    %v75 = vpop.permute.xlu0 %74
    %76 = vrot.lane.b32.xlu0 %v63, 16
    %v77 = vpop.permute.xlu0 %76
    %78 = vrot.lane.b32.xlu0 %v65, 16
    %v79 = vpop.permute.xlu0 %78
    %80 = vrot.lane.b32.xlu0 %v67, 16
    %v81 = vpop.permute.xlu0 %80
    %82 = vrot.lane.b32.xlu0 %v69, 16
    %v83 = vpop.permute.xlu0 %82
    %84 = vrot.lane.b32.xlu0 %v68, 16
    %v85 = vpop.permute.xlu0 %84
    %vm94 = vcmask 1045504
    %v95 = vrot.slane %v38, 2
    %v96 = vrot.slane %v39, 2
    %v97 = vsel %vm94, %v95, %v96
    %v98 = vrot.slane %v40, 2
    %v99 = vsel %vm94, %v96, %v98
    %v100 = vrot.slane %v41, 2
    %v101 = vsel %vm94, %v98, %v100
    %v102 = vrot.slane %v42, 2
    %v103 = vsel %vm94, %v100, %v102
    %v104 = vrot.slane %v43, 2
    %v105 = vsel %vm94, %v102, %v104
    %v106 = vrot.slane %v44, 2
    %v107 = vsel %vm94, %v104, %v106
    %v108 = vrot.slane %v45, 2
    %v109 = vsel %vm94, %v106, %v108
    %110 = vrot.lane.b32.xlu0 %v97, 32
    %v111 = vpop.permute.xlu0 %110
    %112 = vrot.lane.b32.xlu0 %v99, 32
    %v113 = vpop.permute.xlu0 %112
    %114 = vrot.lane.b32.xlu0 %v101, 32
    %v115 = vpop.permute.xlu0 %114
    %116 = vrot.lane.b32.xlu0 %v103, 32
    %v117 = vpop.permute.xlu0 %116
    %118 = vrot.lane.b32.xlu0 %v105, 32
    %v119 = vpop.permute.xlu0 %118
    %120 = vrot.lane.b32.xlu0 %v107, 32
    %v121 = vpop.permute.xlu0 %120
    %122 = vrot.lane.b32.xlu0 %v109, 32
    %v123 = vpop.permute.xlu0 %122
    %124 = vrot.lane.b32.xlu0 %v108, 32
    %v125 = vpop.permute.xlu0 %124
    %vm134 = vcmask 1044480
    %v135 = vrot.slane %v38, 3
    %v136 = vrot.slane %v39, 3
    %v137 = vsel %vm134, %v135, %v136
    %v138 = vrot.slane %v40, 3
    %v139 = vsel %vm134, %v136, %v138
    %v140 = vrot.slane %v41, 3
    %v141 = vsel %vm134, %v138, %v140
    %v142 = vrot.slane %v42, 3
    %v143 = vsel %vm134, %v140, %v142
    %v144 = vrot.slane %v43, 3
    %v145 = vsel %vm134, %v142, %v144
    %v146 = vrot.slane %v44, 3
    %v147 = vsel %vm134, %v144, %v146
    %v148 = vrot.slane %v45, 3
    %v149 = vsel %vm134, %v146, %v148
    %150 = vrot.lane.b32.xlu0 %v137, 48
    %v151 = vpop.permute.xlu0 %150
    %152 = vrot.lane.b32.xlu0 %v139, 48
    %v153 = vpop.permute.xlu0 %152
    %154 = vrot.lane.b32.xlu0 %v141, 48
    %v155 = vpop.permute.xlu0 %154
    %156 = vrot.lane.b32.xlu0 %v143, 48
    %v157 = vpop.permute.xlu0 %156
    %158 = vrot.lane.b32.xlu0 %v145, 48
    %v159 = vpop.permute.xlu0 %158
    %160 = vrot.lane.b32.xlu0 %v147, 48
    %v161 = vpop.permute.xlu0 %160
    %162 = vrot.lane.b32.xlu0 %v149, 48
    %v163 = vpop.permute.xlu0 %162
    %164 = vrot.lane.b32.xlu0 %v148, 48
    %v165 = vpop.permute.xlu0 %164
    %vm174 = vcmask 1043456
    %v175 = vrot.slane %v38, 4
    %v176 = vrot.slane %v39, 4
    %v177 = vsel %vm174, %v175, %v176
    %v178 = vrot.slane %v40, 4
    %v179 = vsel %vm174, %v176, %v178
    %v180 = vrot.slane %v41, 4
    %v181 = vsel %vm174, %v178, %v180
    %v182 = vrot.slane %v42, 4
    %v183 = vsel %vm174, %v180, %v182
    %v184 = vrot.slane %v43, 4
    %v185 = vsel %vm174, %v182, %v184
    %v186 = vrot.slane %v44, 4
    %v187 = vsel %vm174, %v184, %v186
    %v188 = vrot.slane %v45, 4
    %v189 = vsel %vm174, %v186, %v188
    %190 = vrot.lane.b32.xlu0 %v177, 64
    %v191 = vpop.permute.xlu0 %190
    %192 = vrot.lane.b32.xlu0 %v179, 64
    %v193 = vpop.permute.xlu0 %192
    %194 = vrot.lane.b32.xlu0 %v181, 64
    %v195 = vpop.permute.xlu0 %194
    %196 = vrot.lane.b32.xlu0 %v183, 64
    %v197 = vpop.permute.xlu0 %196
    %198 = vrot.lane.b32.xlu0 %v185, 64
    %v199 = vpop.permute.xlu0 %198
    %200 = vrot.lane.b32.xlu0 %v187, 64
    %v201 = vpop.permute.xlu0 %200
    %202 = vrot.lane.b32.xlu0 %v189, 64
    %v203 = vpop.permute.xlu0 %202
    %204 = vrot.lane.b32.xlu0 %v188, 64
    %v205 = vpop.permute.xlu0 %204
    %vm214 = vcmask 1042432
    %v215 = vrot.slane %v38, 5
    %v216 = vrot.slane %v39, 5
    %v217 = vsel %vm214, %v215, %v216
    %v218 = vrot.slane %v40, 5
    %v219 = vsel %vm214, %v216, %v218
    %v220 = vrot.slane %v41, 5
    %v221 = vsel %vm214, %v218, %v220
    %v222 = vrot.slane %v42, 5
    %v223 = vsel %vm214, %v220, %v222
    %v224 = vrot.slane %v43, 5
    %v225 = vsel %vm214, %v222, %v224
    %v226 = vrot.slane %v44, 5
    %v227 = vsel %vm214, %v224, %v226
    %v228 = vrot.slane %v45, 5
    %v229 = vsel %vm214, %v226, %v228
    %230 = vrot.lane.b32.xlu0 %v217, 80
    %v231 = vpop.permute.xlu0 %230
    %232 = vrot.lane.b32.xlu0 %v219, 80
    %v233 = vpop.permute.xlu0 %232
    %234 = vrot.lane.b32.xlu0 %v221, 80
    %v235 = vpop.permute.xlu0 %234
    %236 = vrot.lane.b32.xlu0 %v223, 80
    %v237 = vpop.permute.xlu0 %236
    %238 = vrot.lane.b32.xlu0 %v225, 80
    %v239 = vpop.permute.xlu0 %238
    %240 = vrot.lane.b32.xlu0 %v227, 80
    %v241 = vpop.permute.xlu0 %240
    %242 = vrot.lane.b32.xlu0 %v229, 80
    %v243 = vpop.permute.xlu0 %242
    %244 = vrot.lane.b32.xlu0 %v228, 80
    %v245 = vpop.permute.xlu0 %244
    %vm254 = vcmask 1041408
    %v255 = vrot.slane %v38, 6
    %v256 = vrot.slane %v39, 6
    %v257 = vsel %vm254, %v255, %v256
    %v258 = vrot.slane %v40, 6
    %v259 = vsel %vm254, %v256, %v258
    %v260 = vrot.slane %v41, 6
    %v261 = vsel %vm254, %v258, %v260
    %v262 = vrot.slane %v42, 6
    %v263 = vsel %vm254, %v260, %v262
    %v264 = vrot.slane %v43, 6
    %v265 = vsel %vm254, %v262, %v264
    %v266 = vrot.slane %v44, 6
    %v267 = vsel %vm254, %v264, %v266
    %v268 = vrot.slane %v45, 6
    %v269 = vsel %vm254, %v266, %v268
    %270 = vrot.lane.b32.xlu0 %v257, 96
    %v271 = vpop.permute.xlu0 %270
    %272 = vrot.lane.b32.xlu0 %v259, 96
    %v273 = vpop.permute.xlu0 %272
    %274 = vrot.lane.b32.xlu0 %v261, 96
    %v275 = vpop.permute.xlu0 %274
    %276 = vrot.lane.b32.xlu0 %v263, 96
    %v277 = vpop.permute.xlu0 %276
    %278 = vrot.lane.b32.xlu0 %v265, 96
    %v279 = vpop.permute.xlu0 %278
    %280 = vrot.lane.b32.xlu0 %v267, 96
    %v281 = vpop.permute.xlu0 %280
    %282 = vrot.lane.b32.xlu0 %v269, 96
    %v283 = vpop.permute.xlu0 %282
    %284 = vrot.lane.b32.xlu0 %v268, 96
    %v285 = vpop.permute.xlu0 %284
    %vm294 = vcmask 130048
    %v295 = vsel %vm294, %v38, %v71
    %v296 = vsel %vm294, %v39, %v73
    %v297 = vsel %vm294, %v40, %v75
    %v298 = vsel %vm294, %v41, %v77
    %v299 = vsel %vm294, %v42, %v79
    %v300 = vsel %vm294, %v43, %v81
    %v301 = vsel %vm294, %v44, %v83
    %v302 = vsel %vm294, %v45, %v85
    %vm303 = vcmask 261120
    %v304 = vsel %vm303, %v295, %v111
    %v305 = vsel %vm303, %v296, %v113
    %v306 = vsel %vm303, %v297, %v115
    %v307 = vsel %vm303, %v298, %v117
    %v308 = vsel %vm303, %v299, %v119
    %v309 = vsel %vm303, %v300, %v121
    %v310 = vsel %vm303, %v301, %v123
    %v311 = vsel %vm303, %v302, %v125
    %vm312 = vcmask 392192
    %v313 = vsel %vm312, %v304, %v151
    %v314 = vsel %vm312, %v305, %v153
    %v315 = vsel %vm312, %v306, %v155
    %v316 = vsel %vm312, %v307, %v157
    %v317 = vsel %vm312, %v308, %v159
    %v318 = vsel %vm312, %v309, %v161
    %v319 = vsel %vm312, %v310, %v163
    %v320 = vsel %vm312, %v311, %v165
    %vm321 = vcmask 523264
    %v322 = vsel %vm321, %v313, %v191
    %v323 = vsel %vm321, %v314, %v193
    %v324 = vsel %vm321, %v315, %v195
    %v325 = vsel %vm321, %v316, %v197
    %v326 = vsel %vm321, %v317, %v199
    %v327 = vsel %vm321, %v318, %v201
    %v328 = vsel %vm321, %v319, %v203
    %v329 = vsel %vm321, %v320, %v205
    %vm330 = vcmask 654336
    %v331 = vsel %vm330, %v322, %v231
    %v332 = vsel %vm330, %v323, %v233
    %v333 = vsel %vm330, %v324, %v235
    %v334 = vsel %vm330, %v325, %v237
    %v335 = vsel %vm330, %v326, %v239
    %v336 = vsel %vm330, %v327, %v241
    %v337 = vsel %vm330, %v328, %v243
    %v338 = vsel %vm330, %v329, %v245
    %vm339 = vcmask 785408
    %v340 = vsel %vm339, %v331, %v271
    %v341 = vsel %vm339, %v332, %v273
    %v342 = vsel %vm339, %v333, %v275
    %v343 = vsel %vm339, %v334, %v277
    %v344 = vsel %vm339, %v335, %v279
    %v345 = vsel %vm339, %v336, %v281
    %v346 = vsel %vm339, %v337, %v283
    %v347 = vsel %vm339, %v338, %v285
    %v348 = vld [vmem:[%s1] sm:$0xff]
    %v349 = vld [vmem:[%s1 + $0x8] sm:$0xff]
    %v350 = vld [vmem:[%s1 + $0x10] sm:$0xff]
    %v351 = vld [vmem:[%s1 + $0x18] sm:$0xff]
    %v352 = vld [vmem:[%s1 + $0x20] sm:$0xff]
    %v353 = vld [vmem:[%s1 + $0x28] sm:$0xff]
    %v354 = vld [vmem:[%s1 + $0x30] sm:$0xff]
    %v355 = vld [vmem:[%s1 + $0x38] sm:$0xff]
    %v356 = vld [vmem:[%s1 + $0x40] sm:$0xff]
    %v357 = vld [vmem:[%s1 + $0x48] sm:$0xff]
    %v358 = vld [vmem:[%s1 + $0x50] sm:$0xff]
    %v359 = vld [vmem:[%s1 + $0x58] sm:$0xff]
    %v360 = vld [vmem:[%s1 + $0x60] sm:$0xff]
    %v361 = vld [vmem:[%s1 + $0x68] sm:$0xff]
    %v362 = vld [vmem:[%s2] sm:$0x1]
    %v364 = vlaneseq
    %v365 = vshrl.u32 %v364, 7
    %v366 = vsub.s32 0, %v365
    %v367 = vrot.slane %v362, %v366
    %vm369 = vcmask 916480
    %v371 = vsel %vm369, %v340, 0
    %v374 = vsel %vm369, %v341, 0
    %v377 = vsel %vm369, %v342, 0
    %v380 = vsel %vm369, %v343, 0
    %v383 = vsel %vm369, %v344, 0
    %v386 = vsel %vm369, %v345, 0
    %v389 = vsel %vm369, %v346, 0
    %v392 = vsel %vm369, %v347, 0
    %394 = vmatprep.subr.mxu0 0.0
    %395 = vmatpush1.msra.mxu0 %v348
    %396 = vmatprep.subr.mxu0 0.0
    %397 = vmatpush1.msra.mxu0 %v349
    %398 = vmatprep.subr.mxu0 0.0
    %399 = vmatpush1.msra.mxu0 %v350
    %400 = vmatprep.subr.mxu0 0.0
    %401 = vmatpush1.msra.mxu0 %v351
    %402 = vmatprep.subr.mxu0 0.0
    %403 = vmatpush1.msra.mxu0 %v352
    %404 = vmatprep.subr.mxu0 0.0
    %405 = vmatpush1.msra.mxu0 %v353
    %406 = vmatprep.subr.mxu0 0.0
    %407 = vmatpush1.msra.mxu0 %v354
    %408 = vmatprep.subr.mxu0 0.0
    %409 = vmatpush1.msra.mxu0 %v355
    %410 = vmatprep.subr.mxu0 0.0
    %411 = vmatpush1.msra.mxu0 %v356
    %412 = vmatprep.subr.mxu0 0.0
    %413 = vmatpush1.msra.mxu0 %v357
    %414 = vmatprep.subr.mxu0 0.0
    %415 = vmatpush1.msra.mxu0 %v358
    %416 = vmatprep.subr.mxu0 0.0
    %417 = vmatpush1.msra.mxu0 %v359
    %418 = vmatprep.subr.mxu0 0.0
    %419 = vmatpush1.msra.mxu0 %v360
    %420 = vmatprep.subr.mxu0 0.0
    %421 = vmatpush1.msra.mxu0 %v361
    %422 = vmatprep.subr.mxu0 0.0
    %423 = vmatpush1.msra.mxu0 0.0
    %424 = vmatprep.subr.mxu0 0.0
    %425 = vmatpush1.msra.mxu0 0.0
    %426 = vmatprep.subr.mxu0 0.0
    %427 = vmatpush1.msra.mxu0 0.0
    %428 = vmatprep.subr.mxu0 0.0
    %429 = vmatpush1.msra.mxu0 0.0
    %430 = vmatprep.subr.mxu0 0.0
    %431 = vmatpush1.msra.mxu0 0.0
    %432 = vmatprep.subr.mxu0 0.0
    %433 = vmatpush1.msra.mxu0 0.0
    %434 = vmatprep.subr.mxu0 0.0
    %435 = vmatpush1.msra.mxu0 0.0
    %436 = vmatprep.subr.mxu0 0.0
    %437 = vmatpush1.msra.mxu0 0.0
    %438 = vmatprep.subr.mxu0 0.0
    %439 = vmatpush1.msra.mxu0 0.0
    %440 = vmatprep.subr.mxu0 0.0
    %441 = vmatpush1.msra.mxu0 0.0
    %442 = vmatprep.subr.mxu0 0.0
    %443 = vmatpush1.msra.mxu0 0.0
    %444 = vmatprep.subr.mxu0 0.0
    %445 = vmatpush1.msra.mxu0 0.0
    %446 = vmatprep.subr.mxu0 0.0
    %447 = vmatpush1.msra.mxu0 0.0
    %448 = vmatprep.subr.mxu0 0.0
    %449 = vmatpush1.msra.mxu0 0.0
    %450 = vmatprep.subr.mxu0 0.0
    %451 = vmatpush1.msra.mxu0 0.0
    %452 = vmatprep.subr.mxu0 0.0
    %453 = vmatpush1.msra.mxu0 0.0
    %454 = vmatprep.subr.mxu0 0.0
    %455 = vmatpush1.msra.mxu0 0.0
    %456 = vmatprep.subr.mxu0 0.0
    %457 = vmatpush1.msra.mxu0 0.0
    %458 = vmatprep.mubr.f32.mxu0 0.0
    %459 = vmatmul.mubr.f32.gmra.mrb[0].mxu0 %v371
    %v460 = vpop.f32.mrb[0].mxu0
    %v461 = vadd.f32 %v367, %v460
    %v462 = vpop.f32.mrb[0].mxu0
    %463 = vmatprep.mubr.f32.mxu0 0.0
    %464 = vmatmul.mubr.f32.gmra.mrb[0].mxu0 %v374
    %v465 = vpop.f32.mrb[0].mxu0
    %v466 = vadd.f32 %v367, %v465
    %v467 = vpop.f32.mrb[0].mxu0
    %468 = vmatprep.mubr.f32.mxu0 0.0
    %469 = vmatmul.mubr.f32.gmra.mrb[0].mxu0 %v377
    %v470 = vpop.f32.mrb[0].mxu0
    %v471 = vadd.f32 %v367, %v470
    %v472 = vpop.f32.mrb[0].mxu0
    %473 = vmatprep.mubr.f32.mxu0 0.0
    %474 = vmatmul.mubr.f32.gmra.mrb[0].mxu0 %v380
    %v475 = vpop.f32.mrb[0].mxu0
    %v476 = vadd.f32 %v367, %v475
    %v477 = vpop.f32.mrb[0].mxu0
    %478 = vmatprep.mubr.f32.mxu0 0.0
    %479 = vmatmul.mubr.f32.gmra.mrb[0].mxu0 %v383
    %v480 = vpop.f32.mrb[0].mxu0
    %v481 = vadd.f32 %v367, %v480
    %v482 = vpop.f32.mrb[0].mxu0
    %483 = vmatprep.mubr.f32.mxu0 0.0
    %484 = vmatmul.mubr.f32.gmra.mrb[0].mxu0 %v386
    %v485 = vpop.f32.mrb[0].mxu0
    %v486 = vadd.f32 %v367, %v485
    %v487 = vpop.f32.mrb[0].mxu0
    %488 = vmatprep.mubr.f32.mxu0 0.0
    %489 = vmatmul.mubr.f32.gmra.mrb[0].mxu0 %v389
    %v490 = vpop.f32.mrb[0].mxu0
    %v491 = vadd.f32 %v367, %v490
    %v492 = vpop.f32.mrb[0].mxu0
    %493 = vmatprep.mubr.f32.mxu0 0.0
    %494 = vmatmul.mubr.f32.gmra.mrb[0].mxu0 %v392
    %v495 = vpop.f32.mrb[0].mxu0
    %v496 = vadd.f32 %v367, %v495
    %v497 = vpop.f32.mrb[0].mxu0
    %498 = vdwg.mxu0
    %vm499 = vcmp.gt.f32.partialorder %v461, 0.0
    %vm500 = vcmp.gt.f32.partialorder %v466, 0.0
    %vm501 = vcmp.gt.f32.partialorder %v471, 0.0
    %vm502 = vcmp.gt.f32.partialorder %v476, 0.0
    %vm503 = vcmp.gt.f32.partialorder %v481, 0.0
    %vm504 = vcmp.gt.f32.partialorder %v486, 0.0
    %vm505 = vcmp.gt.f32.partialorder %v491, 0.0
    %vm506 = vcmp.gt.f32.partialorder %v496, 0.0
    %v507 = vmul.f32 %v461, 0.1
    %v508 = vmul.f32 %v466, 0.1
    %v509 = vmul.f32 %v471, 0.1
    %v510 = vmul.f32 %v476, 0.1
    %v511 = vmul.f32 %v481, 0.1
    %v512 = vmul.f32 %v486, 0.1
    %v513 = vmul.f32 %v491, 0.1
    %v514 = vmul.f32 %v496, 0.1
    %v515 = vsel %vm499, %v461, %v507
    %v516 = vsel %vm500, %v466, %v508
    %v517 = vsel %vm501, %v471, %v509
    %v518 = vsel %vm502, %v476, %v510
    %v519 = vsel %vm503, %v481, %v511
    %v520 = vsel %vm504, %v486, %v512
    %v521 = vsel %vm505, %v491, %v513
    %v522 = vsel %vm506, %v496, %v514
    %v530 = vrot.slane %v515, 3
    %v531 = vrot.slane %v516, 3
    %v532 = vsel %vm134, %v530, %v531
    %v533 = vrot.slane %v517, 3
    %v534 = vsel %vm134, %v531, %v533
    %v535 = vrot.slane %v518, 3
    %v536 = vsel %vm134, %v533, %v535
    %v537 = vrot.slane %v519, 3
    %v538 = vsel %vm134, %v535, %v537
    %v539 = vrot.slane %v520, 3
    %v540 = vsel %vm134, %v537, %v539
    %v541 = vrot.slane %v521, 3
    %v542 = vsel %vm134, %v539, %v541
    %543 = vrot.lane.b32.xlu0 %v532, 32
    %v544 = vpop.permute.xlu0 %543
    %545 = vrot.lane.b32.xlu0 %v534, 32
    %v546 = vpop.permute.xlu0 %545
    %547 = vrot.lane.b32.xlu0 %v536, 32
    %v548 = vpop.permute.xlu0 %547
    %549 = vrot.lane.b32.xlu0 %v538, 32
    %v550 = vpop.permute.xlu0 %549
    %551 = vrot.lane.b32.xlu0 %v540, 32
    %v552 = vpop.permute.xlu0 %551
    %553 = vrot.lane.b32.xlu0 %v542, 32
    %v554 = vpop.permute.xlu0 %553
    %555 = vrot.lane.b32.xlu0 %v541, 32
    %v556 = vpop.permute.xlu0 %555
    %v565 = vrot.slane %v515, 6
    %v566 = vrot.slane %v516, 6
    %v567 = vsel %vm254, %v565, %v566
    %v568 = vrot.slane %v517, 6
    %v569 = vsel %vm254, %v566, %v568
    %v570 = vrot.slane %v518, 6
    %v571 = vsel %vm254, %v568, %v570
    %v572 = vrot.slane %v519, 6
    %v573 = vsel %vm254, %v570, %v572
    %v574 = vrot.slane %v520, 6
    %v575 = vsel %vm254, %v572, %v574
    %v576 = vrot.slane %v521, 6
    %v577 = vsel %vm254, %v574, %v576
    %v578 = vrot.slane %v522, 6
    %v579 = vsel %vm254, %v576, %v578
    %580 = vrot.lane.b32.xlu0 %v567, 64
    %v581 = vpop.permute.xlu0 %580
    %582 = vrot.lane.b32.xlu0 %v569, 64
    %v583 = vpop.permute.xlu0 %582
    %584 = vrot.lane.b32.xlu0 %v571, 64
    %v585 = vpop.permute.xlu0 %584
    %586 = vrot.lane.b32.xlu0 %v573, 64
    %v587 = vpop.permute.xlu0 %586
    %588 = vrot.lane.b32.xlu0 %v575, 64
    %v589 = vpop.permute.xlu0 %588
    %590 = vrot.lane.b32.xlu0 %v577, 64
    %v591 = vpop.permute.xlu0 %590
    %592 = vrot.lane.b32.xlu0 %v579, 64
    %v593 = vpop.permute.xlu0 %592
    %v601 = vsel %vm303, %v515, %v544
    %v602 = vsel %vm303, %v516, %v546
    %v603 = vsel %vm303, %v517, %v548
    %v604 = vsel %vm303, %v518, %v550
    %v605 = vsel %vm303, %v519, %v552
    %v606 = vsel %vm303, %v520, %v554
    %v607 = vsel %vm303, %v521, %v556
    %v608 = vsel %vm321, %v601, %v581
    %v609 = vsel %vm321, %v602, %v583
    %v610 = vsel %vm321, %v603, %v585
    %v611 = vsel %vm321, %v604, %v587
    %v612 = vsel %vm321, %v605, %v589
    %v613 = vsel %vm321, %v606, %v591
    %v614 = vsel %vm321, %v607, %v593
    %v615 = vld [vmem:[#allocation2] sm:$0xff]
    %v616 = vld [vmem:[#allocation2 + $0x8] sm:$0xff]
    %v617 = vld [vmem:[#allocation2 + $0x10] sm:$0xff]
    %v618 = vld [vmem:[#allocation2 + $0x18] sm:$0xff]
    %v619 = vld [vmem:[#allocation2 + $0x20] sm:$0xff]
    %v620 = vld [vmem:[#allocation2 + $0x28] sm:$0xff]
    %v621 = vld [vmem:[#allocation2 + $0x30] sm:$0xff]
    %v622 = vld [vmem:[#allocation2 + $0x38] sm:$0xff]
    %v623 = vld [vmem:[#allocation2 + $0x40] sm:$0xff]
    %v624 = vld [vmem:[#allocation2 + $0x48] sm:$0xff]
    %v625 = vld [vmem:[#allocation2 + $0x50] sm:$0xff]
    %v626 = vld [vmem:[#allocation2 + $0x58] sm:$0xff]
    %v627 = vld [vmem:[%s4] sm:$0x1]
    %v629 = vlaneseq
    %v630 = vshrl.u32 %v629, 7
    %v631 = vsub.s32 0, %v630
    %v632 = vrot.slane %v627, %v631
    %v635 = vsel %vm339, %v608, 0
    %v638 = vsel %vm339, %v609, 0
    %v641 = vsel %vm339, %v610, 0
    %v644 = vsel %vm339, %v611, 0
    %v647 = vsel %vm339, %v612, 0
    %v650 = vsel %vm339, %v613, 0
    %v653 = vsel %vm339, %v614, 0
    %655 = vmatprep.subr.mxu0 0.0
    %656 = vmatpush1.msra.mxu0 %v615
    %657 = vmatprep.subr.mxu0 0.0
    %658 = vmatpush1.msra.mxu0 %v616
    %659 = vmatprep.subr.mxu0 0.0
    %660 = vmatpush1.msra.mxu0 %v617
    %661 = vmatprep.subr.mxu0 0.0
    %662 = vmatpush1.msra.mxu0 %v618
    %663 = vmatprep.subr.mxu0 0.0
    %664 = vmatpush1.msra.mxu0 %v619
    %665 = vmatprep.subr.mxu0 0.0
    %666 = vmatpush1.msra.mxu0 %v620
    %667 = vmatprep.subr.mxu0 0.0
    %668 = vmatpush1.msra.mxu0 %v621
    %669 = vmatprep.subr.mxu0 0.0
    %670 = vmatpush1.msra.mxu0 %v622
    %671 = vmatprep.subr.mxu0 0.0
    %672 = vmatpush1.msra.mxu0 %v623
    %673 = vmatprep.subr.mxu0 0.0
    %674 = vmatpush1.msra.mxu0 %v624
    %675 = vmatprep.subr.mxu0 0.0
    %676 = vmatpush1.msra.mxu0 %v625
    %677 = vmatprep.subr.mxu0 0.0
    %678 = vmatpush1.msra.mxu0 %v626
    %679 = vmatprep.subr.mxu0 0.0
    %680 = vmatpush1.msra.mxu0 0.0
    %681 = vmatprep.subr.mxu0 0.0
    %682 = vmatpush1.msra.mxu0 0.0
    %683 = vmatprep.subr.mxu0 0.0
    %684 = vmatpush1.msra.mxu0 0.0
    %685 = vmatprep.subr.mxu0 0.0
    %686 = vmatpush1.msra.mxu0 0.0
    %687 = vmatprep.subr.mxu0 0.0
    %688 = vmatpush1.msra.mxu0 0.0
    %689 = vmatprep.subr.mxu0 0.0
    %690 = vmatpush1.msra.mxu0 0.0
    %691 = vmatprep.subr.mxu0 0.0
    %692 = vmatpush1.msra.mxu0 0.0
    %693 = vmatprep.subr.mxu0 0.0
    %694 = vmatpush1.msra.mxu0 0.0
    %695 = vmatprep.subr.mxu0 0.0
    %696 = vmatpush1.msra.mxu0 0.0
    %697 = vmatprep.subr.mxu0 0.0
    %698 = vmatpush1.msra.mxu0 0.0
    %699 = vmatprep.subr.mxu0 0.0
    %700 = vmatpush1.msra.mxu0 0.0
    %701 = vmatprep.subr.mxu0 0.0
    %702 = vmatpush1.msra.mxu0 0.0
    %703 = vmatprep.subr.mxu0 0.0
    %704 = vmatpush1.msra.mxu0 0.0
    %705 = vmatprep.subr.mxu0 0.0
    %706 = vmatpush1.msra.mxu0 0.0
    %707 = vmatprep.subr.mxu0 0.0
    %708 = vmatpush1.msra.mxu0 0.0
    %709 = vmatprep.subr.mxu0 0.0
    %710 = vmatpush1.msra.mxu0 0.0
    %711 = vmatprep.subr.mxu0 0.0
    %712 = vmatpush1.msra.mxu0 0.0
    %713 = vmatprep.subr.mxu0 0.0
    %714 = vmatpush1.msra.mxu0 0.0
    %715 = vmatprep.subr.mxu0 0.0
    %716 = vmatpush1.msra.mxu0 0.0
    %717 = vmatprep.subr.mxu0 0.0
    %718 = vmatpush1.msra.mxu0 0.0
    %719 = vmatprep.mubr.f32.mxu0 0.0
    %720 = vmatmul.mubr.f32.gmra.mrb[0].mxu0 %v635
    %v721 = vpop.f32.mrb[0].mxu0
    %v722 = vadd.f32 %v632, %v721
    %v723 = vpop.f32.mrb[0].mxu0
    %724 = vmatprep.mubr.f32.mxu0 0.0
    %725 = vmatmul.mubr.f32.gmra.mrb[0].mxu0 %v638
    %v726 = vpop.f32.mrb[0].mxu0
    %v727 = vadd.f32 %v632, %v726
    %v728 = vpop.f32.mrb[0].mxu0
    %729 = vmatprep.mubr.f32.mxu0 0.0
    %730 = vmatmul.mubr.f32.gmra.mrb[0].mxu0 %v641
    %v731 = vpop.f32.mrb[0].mxu0
    %v732 = vadd.f32 %v632, %v731
    %v733 = vpop.f32.mrb[0].mxu0
    %734 = vmatprep.mubr.f32.mxu0 0.0
    %735 = vmatmul.mubr.f32.gmra.mrb[0].mxu0 %v644
    %v736 = vpop.f32.mrb[0].mxu0
    %v737 = vadd.f32 %v632, %v736
    %v738 = vpop.f32.mrb[0].mxu0
    %739 = vmatprep.mubr.f32.mxu0 0.0
    %740 = vmatmul.mubr.f32.gmra.mrb[0].mxu0 %v647
    %v741 = vpop.f32.mrb[0].mxu0
    %v742 = vadd.f32 %v632, %v741
    %v743 = vpop.f32.mrb[0].mxu0
    %744 = vmatprep.mubr.f32.mxu0 0.0
    %745 = vmatmul.mubr.f32.gmra.mrb[0].mxu0 %v650
    %v746 = vpop.f32.mrb[0].mxu0
    %v747 = vadd.f32 %v632, %v746
    %v748 = vpop.f32.mrb[0].mxu0
    %749 = vmatprep.mubr.f32.mxu0 0.0
    %750 = vmatmul.mubr.f32.gmra.mrb[0].mxu0 %v653
    %v751 = vpop.f32.mrb[0].mxu0
    %v752 = vadd.f32 %v632, %v751
    %v753 = vpop.f32.mrb[0].mxu0
    %754 = vdwg.mxu0
    %v762 = vrot.slane %v461, 3
    %v763 = vrot.slane %v466, 3
    %v764 = vsel %vm134, %v762, %v763
    %v765 = vrot.slane %v471, 3
    %v766 = vsel %vm134, %v763, %v765
    %v767 = vrot.slane %v476, 3
    %v768 = vsel %vm134, %v765, %v767
    %v769 = vrot.slane %v481, 3
    %v770 = vsel %vm134, %v767, %v769
    %v771 = vrot.slane %v486, 3
    %v772 = vsel %vm134, %v769, %v771
    %v773 = vrot.slane %v491, 3
    %v774 = vsel %vm134, %v771, %v773
    %v782 = vadd.f32 %v722, %v764
    %v783 = vadd.f32 %v727, %v766
    %v784 = vadd.f32 %v732, %v768
    %v785 = vadd.f32 %v737, %v770
    %v786 = vadd.f32 %v742, %v772
    %v787 = vadd.f32 %v747, %v774
    %v788 = vadd.f32 %v752, %v773
    %vm789 = vcmp.gt.f32.partialorder %v782, 0.0
    %vm790 = vcmp.gt.f32.partialorder %v783, 0.0
    %vm791 = vcmp.gt.f32.partialorder %v784, 0.0
    %vm792 = vcmp.gt.f32.partialorder %v785, 0.0
    %vm793 = vcmp.gt.f32.partialorder %v786, 0.0
    %vm794 = vcmp.gt.f32.partialorder %v787, 0.0
    %vm795 = vcmp.gt.f32.partialorder %v788, 0.0
    %v796 = vmul.f32 %v782, 0.1
    %v797 = vmul.f32 %v783, 0.1
    %v798 = vmul.f32 %v784, 0.1
    %v799 = vmul.f32 %v785, 0.1
    %v800 = vmul.f32 %v786, 0.1
    %v801 = vmul.f32 %v787, 0.1
    %v802 = vmul.f32 %v788, 0.1
    %v803 = vsel %vm789, %v782, %v796
    %v804 = vsel %vm790, %v783, %v797
    %v805 = vsel %vm791, %v784, %v798
    %v806 = vsel %vm792, %v785, %v799
    %v807 = vsel %vm793, %v786, %v800
    %v808 = vsel %vm794, %v787, %v801
    %v809 = vsel %vm795, %v788, %v802
    %v817 = vrot.slane %v803, 3
    %v818 = vrot.slane %v804, 3
    %v819 = vsel %vm134, %v817, %v818
    %v820 = vrot.slane %v805, 3
    %v821 = vsel %vm134, %v818, %v820
    %v822 = vrot.slane %v806, 3
    %v823 = vsel %vm134, %v820, %v822
    %v824 = vrot.slane %v807, 3
    %v825 = vsel %vm134, %v822, %v824
    %v826 = vrot.slane %v808, 3
    %v827 = vsel %vm134, %v824, %v826
    %v828 = vrot.slane %v809, 3
    %v829 = vsel %vm134, %v826, %v828
    %830 = vrot.lane.b32.xlu0 %v819, 32
    %v831 = vpop.permute.xlu0 %830
    %832 = vrot.lane.b32.xlu0 %v821, 32
    %v833 = vpop.permute.xlu0 %832
    %834 = vrot.lane.b32.xlu0 %v823, 32
    %v835 = vpop.permute.xlu0 %834
    %836 = vrot.lane.b32.xlu0 %v825, 32
    %v837 = vpop.permute.xlu0 %836
    %838 = vrot.lane.b32.xlu0 %v827, 32
    %v839 = vpop.permute.xlu0 %838
    %840 = vrot.lane.b32.xlu0 %v829, 32
    %v841 = vpop.permute.xlu0 %840
    %v848 = vrot.slane %v803, 6
    %v849 = vrot.slane %v804, 6
    %v850 = vsel %vm254, %v848, %v849
    %v851 = vrot.slane %v805, 6
    %v852 = vsel %vm254, %v849, %v851
    %v853 = vrot.slane %v806, 6
    %v854 = vsel %vm254, %v851, %v853
    %v855 = vrot.slane %v807, 6
    %v856 = vsel %vm254, %v853, %v855
    %v857 = vrot.slane %v808, 6
    %v858 = vsel %vm254, %v855, %v857
    %v859 = vrot.slane %v809, 6
    %v860 = vsel %vm254, %v857, %v859
    %861 = vrot.lane.b32.xlu0 %v850, 64
    %v862 = vpop.permute.xlu0 %861
    %863 = vrot.lane.b32.xlu0 %v852, 64
    %v864 = vpop.permute.xlu0 %863
    %865 = vrot.lane.b32.xlu0 %v854, 64
    %v866 = vpop.permute.xlu0 %865
    %867 = vrot.lane.b32.xlu0 %v856, 64
    %v868 = vpop.permute.xlu0 %867
    %869 = vrot.lane.b32.xlu0 %v858, 64
    %v870 = vpop.permute.xlu0 %869
    %871 = vrot.lane.b32.xlu0 %v860, 64
    %v872 = vpop.permute.xlu0 %871
    %v879 = vsel %vm303, %v803, %v831
    %v880 = vsel %vm303, %v804, %v833
    %v881 = vsel %vm303, %v805, %v835
    %v882 = vsel %vm303, %v806, %v837
    %v883 = vsel %vm303, %v807, %v839
    %v884 = vsel %vm303, %v808, %v841
    %v885 = vsel %vm321, %v879, %v862
    %v886 = vsel %vm321, %v880, %v864
    %v887 = vsel %vm321, %v881, %v866
    %v888 = vsel %vm321, %v882, %v868
    %v889 = vsel %vm321, %v883, %v870
    %v890 = vsel %vm321, %v884, %v872
    %s891 = scalar_lea.vmem [#allocation2], 96
    %v892 = vld [vmem:[%s891] sm:$0xff]
    %v893 = vld [vmem:[%s891 + $0x8] sm:$0xff]
    %v894 = vld [vmem:[%s891 + $0x10] sm:$0xff]
    %v895 = vld [vmem:[%s891 + $0x18] sm:$0xff]
    %v896 = vld [vmem:[%s891 + $0x20] sm:$0xff]
    %v897 = vld [vmem:[%s891 + $0x28] sm:$0xff]
    %v898 = vld [vmem:[%s891 + $0x30] sm:$0xff]
    %v899 = vld [vmem:[%s891 + $0x38] sm:$0xff]
    %v900 = vld [vmem:[%s891 + $0x40] sm:$0xff]
    %v901 = vld [vmem:[%s891 + $0x48] sm:$0xff]
    %v902 = vld [vmem:[%s891 + $0x50] sm:$0xff]
    %v903 = vld [vmem:[%s891 + $0x58] sm:$0xff]
    %s904 = scalar_lea.vmem %s4, 1
    %v905 = vld [vmem:[%s904] sm:$0x1]
    %v907 = vlaneseq
    %v908 = vshrl.u32 %v907, 7
    %v909 = vsub.s32 0, %v908
    %v910 = vrot.slane %v905, %v909
    %v913 = vsel %vm339, %v885, 0
    %v916 = vsel %vm339, %v886, 0
    %v919 = vsel %vm339, %v887, 0
    %v922 = vsel %vm339, %v888, 0
    %v925 = vsel %vm339, %v889, 0
    %v928 = vsel %vm339, %v890, 0
    %930 = vmatprep.subr.mxu0 0.0
    %931 = vmatpush1.msra.mxu0 %v892
    %932 = vmatprep.subr.mxu0 0.0
    %933 = vmatpush1.msra.mxu0 %v893
    %934 = vmatprep.subr.mxu0 0.0
    %935 = vmatpush1.msra.mxu0 %v894
    %936 = vmatprep.subr.mxu0 0.0
    %937 = vmatpush1.msra.mxu0 %v895
    %938 = vmatprep.subr.mxu0 0.0
    %939 = vmatpush1.msra.mxu0 %v896
    %940 = vmatprep.subr.mxu0 0.0
    %941 = vmatpush1.msra.mxu0 %v897
    %942 = vmatprep.subr.mxu0 0.0
    %943 = vmatpush1.msra.mxu0 %v898
    %944 = vmatprep.subr.mxu0 0.0
    %945 = vmatpush1.msra.mxu0 %v899
    %946 = vmatprep.subr.mxu0 0.0
    %947 = vmatpush1.msra.mxu0 %v900
    %948 = vmatprep.subr.mxu0 0.0
    %949 = vmatpush1.msra.mxu0 %v901
    %950 = vmatprep.subr.mxu0 0.0
    %951 = vmatpush1.msra.mxu0 %v902
    %952 = vmatprep.subr.mxu0 0.0
    %953 = vmatpush1.msra.mxu0 %v903
    %954 = vmatprep.subr.mxu0 0.0
    %955 = vmatpush1.msra.mxu0 0.0
    %956 = vmatprep.subr.mxu0 0.0
    %957 = vmatpush1.msra.mxu0 0.0
    %958 = vmatprep.subr.mxu0 0.0
    %959 = vmatpush1.msra.mxu0 0.0
    %960 = vmatprep.subr.mxu0 0.0
    %961 = vmatpush1.msra.mxu0 0.0
    %962 = vmatprep.subr.mxu0 0.0
    %963 = vmatpush1.msra.mxu0 0.0
    %964 = vmatprep.subr.mxu0 0.0
    %965 = vmatpush1.msra.mxu0 0.0
    %966 = vmatprep.subr.mxu0 0.0
    %967 = vmatpush1.msra.mxu0 0.0
    %968 = vmatprep.subr.mxu0 0.0
    %969 = vmatpush1.msra.mxu0 0.0
    %970 = vmatprep.subr.mxu0 0.0
    %971 = vmatpush1.msra.mxu0 0.0
    %972 = vmatprep.subr.mxu0 0.0
    %973 = vmatpush1.msra.mxu0 0.0
    %974 = vmatprep.subr.mxu0 0.0
    %975 = vmatpush1.msra.mxu0 0.0
    %976 = vmatprep.subr.mxu0 0.0
    %977 = vmatpush1.msra.mxu0 0.0
    %978 = vmatprep.subr.mxu0 0.0
    %979 = vmatpush1.msra.mxu0 0.0
    %980 = vmatprep.subr.mxu0 0.0
    %981 = vmatpush1.msra.mxu0 0.0
    %982 = vmatprep.subr.mxu0 0.0
    %983 = vmatpush1.msra.mxu0 0.0
    %984 = vmatprep.subr.mxu0 0.0
    %985 = vmatpush1.msra.mxu0 0.0
    %986 = vmatprep.subr.mxu0 0.0
    %987 = vmatpush1.msra.mxu0 0.0
    %988 = vmatprep.subr.mxu0 0.0
    %989 = vmatpush1.msra.mxu0 0.0
    %990 = vmatprep.subr.mxu0 0.0
    %991 = vmatpush1.msra.mxu0 0.0
    %992 = vmatprep.subr.mxu0 0.0
    %993 = vmatpush1.msra.mxu0 0.0
    %994 = vmatprep.mubr.f32.mxu0 0.0
    %995 = vmatmul.mubr.f32.gmra.mrb[0].mxu0 %v913
    %v996 = vpop.f32.mrb[0].mxu0
    %v997 = vadd.f32 %v910, %v996
    %v998 = vpop.f32.mrb[0].mxu0
    %999 = vmatprep.mubr.f32.mxu0 0.0
    %1000 = vmatmul.mubr.f32.gmra.mrb[0].mxu0 %v916
    %v1001 = vpop.f32.mrb[0].mxu0
    %v1002 = vadd.f32 %v910, %v1001
    %v1003 = vpop.f32.mrb[0].mxu0
    %1004 = vmatprep.mubr.f32.mxu0 0.0
    %1005 = vmatmul.mubr.f32.gmra.mrb[0].mxu0 %v919
    %v1006 = vpop.f32.mrb[0].mxu0
    %v1007 = vadd.f32 %v910, %v1006
    %v1008 = vpop.f32.mrb[0].mxu0
    %1009 = vmatprep.mubr.f32.mxu0 0.0
    %1010 = vmatmul.mubr.f32.gmra.mrb[0].mxu0 %v922
    %v1011 = vpop.f32.mrb[0].mxu0
    %v1012 = vadd.f32 %v910, %v1011
    %v1013 = vpop.f32.mrb[0].mxu0
    %1014 = vmatprep.mubr.f32.mxu0 0.0
    %1015 = vmatmul.mubr.f32.gmra.mrb[0].mxu0 %v925
    %v1016 = vpop.f32.mrb[0].mxu0
    %v1017 = vadd.f32 %v910, %v1016
    %v1018 = vpop.f32.mrb[0].mxu0
    %1019 = vmatprep.mubr.f32.mxu0 0.0
    %1020 = vmatmul.mubr.f32.gmra.mrb[0].mxu0 %v928
    %v1021 = vpop.f32.mrb[0].mxu0
    %v1022 = vadd.f32 %v910, %v1021
    %v1023 = vpop.f32.mrb[0].mxu0
    %1024 = vdwg.mxu0
    %v1032 = vrot.slane %v782, 3
    %v1033 = vrot.slane %v783, 3
    %v1034 = vsel %vm134, %v1032, %v1033
    %v1035 = vrot.slane %v784, 3
    %v1036 = vsel %vm134, %v1033, %v1035
    %v1037 = vrot.slane %v785, 3
    %v1038 = vsel %vm134, %v1035, %v1037
    %v1039 = vrot.slane %v786, 3
    %v1040 = vsel %vm134, %v1037, %v1039
    %v1041 = vrot.slane %v787, 3
    %v1042 = vsel %vm134, %v1039, %v1041
    %v1043 = vrot.slane %v788, 3
    %v1044 = vsel %vm134, %v1041, %v1043
    %v1051 = vadd.f32 %v997, %v1034
    %v1052 = vadd.f32 %v1002, %v1036
    %v1053 = vadd.f32 %v1007, %v1038
    %v1054 = vadd.f32 %v1012, %v1040
    %v1055 = vadd.f32 %v1017, %v1042
    %v1056 = vadd.f32 %v1022, %v1044
    %v1057 = vld [vmem:[%s5] sm:$0x3]
    %vm1058 = vcmask 375808
    %v1060 = vsel %vm1058, %v1057, 0
    %v1063 = vsel %vm94, %v1056, 0
    %1065 = vmatprep.subr.mxu0 0.0
    %1066 = vmatpush1.msra.mxu0 %v1051
    %1067 = vmatprep.subr.mxu0 0.0
    %1068 = vmatpush1.msra.mxu0 %v1052
    %1069 = vmatprep.subr.mxu0 0.0
    %1070 = vmatpush1.msra.mxu0 %v1053
    %1071 = vmatprep.subr.mxu0 0.0
    %1072 = vmatpush1.msra.mxu0 %v1054
    %1073 = vmatprep.subr.mxu0 0.0
    %1074 = vmatpush1.msra.mxu0 %v1055
    %1075 = vmatprep.subr.mxu0 0.0
    %1076 = vmatpush1.msra.mxu0 %v1063
    %1077 = vmatprep.subr.mxu0 0.0
    %1078 = vmatpush1.msra.mxu0 0.0
    %1079 = vmatprep.subr.mxu0 0.0
    %1080 = vmatpush1.msra.mxu0 0.0
    %1081 = vmatprep.subr.mxu0 0.0
    %1082 = vmatpush1.msra.mxu0 0.0
    %1083 = vmatprep.subr.mxu0 0.0
    %1084 = vmatpush1.msra.mxu0 0.0
    %1085 = vmatprep.subr.mxu0 0.0
    %1086 = vmatpush1.msra.mxu0 0.0
    %1087 = vmatprep.subr.mxu0 0.0
    %1088 = vmatpush1.msra.mxu0 0.0
    %1089 = vmatprep.subr.mxu0 0.0
    %1090 = vmatpush1.msra.mxu0 0.0
    %1091 = vmatprep.subr.mxu0 0.0
    %1092 = vmatpush1.msra.mxu0 0.0
    %1093 = vmatprep.subr.mxu0 0.0
    %1094 = vmatpush1.msra.mxu0 0.0
    %1095 = vmatprep.subr.mxu0 0.0
    %1096 = vmatpush1.msra.mxu0 0.0
    %1097 = vmatprep.subr.mxu0 0.0
    %1098 = vmatpush1.msra.mxu0 0.0
    %1099 = vmatprep.subr.mxu0 0.0
    %1100 = vmatpush1.msra.mxu0 0.0
    %1101 = vmatprep.subr.mxu0 0.0
    %1102 = vmatpush1.msra.mxu0 0.0
    %1103 = vmatprep.subr.mxu0 0.0
    %1104 = vmatpush1.msra.mxu0 0.0
    %1105 = vmatprep.subr.mxu0 0.0
    %1106 = vmatpush1.msra.mxu0 0.0
    %1107 = vmatprep.subr.mxu0 0.0
    %1108 = vmatpush1.msra.mxu0 0.0
    %1109 = vmatprep.subr.mxu0 0.0
    %1110 = vmatpush1.msra.mxu0 0.0
    %1111 = vmatprep.subr.mxu0 0.0
    %1112 = vmatpush1.msra.mxu0 0.0
    %1113 = vmatprep.subr.mxu0 0.0
    %1114 = vmatpush1.msra.mxu0 0.0
    %1115 = vmatprep.subr.mxu0 0.0
    %1116 = vmatpush1.msra.mxu0 0.0
    %1117 = vmatprep.subr.mxu0 0.0
    %1118 = vmatpush1.msra.mxu0 0.0
    %1119 = vmatprep.subr.mxu0 0.0
    %1120 = vmatpush1.msra.mxu0 0.0
    %1121 = vmatprep.subr.mxu0 0.0
    %1122 = vmatpush1.msra.mxu0 0.0
    %1123 = vmatprep.subr.mxu0 0.0
    %1124 = vmatpush1.msra.mxu0 0.0
    %1125 = vmatprep.subr.mxu0 0.0
    %1126 = vmatpush1.msra.mxu0 0.0
    %1127 = vmatprep.subr.mxu0 0.0
    %1128 = vmatpush1.msra.mxu0 0.0
    %1129 = vmatprep.mubr.f32.mxu0 0.0
    %1130 = vmatmul.mubr.f32.gmra.mrb[0].mxu0 %v1060
    %v1131 = vpop.f32.mrb[0].mxu0
    %v1132 = vadd.f32 0.0, %v1131
    %v1133 = vpop.f32.mrb[0].mxu0
    %1134 = vdwg.mxu0
    %vm1135 = vcmask 254976
    %1136 = vst.msk [vmem:[#allocation5] sm:$0x3] %vm1135, %v1132
    // Predicated region
    $region30: #{mapping_net_pallas.1} parent=1 // pred_check
      _
    $region31: #{mapping_net_pallas.1} parent=1 // pred_check_branch
      %1138 = sbr.rel (0) target = $region33
    $region32: #{mapping_net_pallas.1} parent=1 // pred_region
      %s1140 = ssub.s32 32, 32
      %1141 = vsyncadd [#allocation4], %s1140
      %s1143 = sshll.u32 [#allocation5], 4
      %s1144 = int_to_ptr.vmem [resolvable:$true] %s1143
      %1146 = dma.vmem_to_hbm [thread:$0]  %s1144, 32, %s6, [#allocation4]
    $region33: #{mapping_net_pallas.1} parent=1 // pred_fallthru
      _
    // Predicated region
    $region34: #{mapping_net_pallas.1} parent=1 // pred_check
      _
    $region35: #{mapping_net_pallas.1} parent=1 // pred_check_branch
      %1148 = sbr.rel (0) target = $region37
    $region36: #{mapping_net_pallas.1} parent=1 // pred_region
      %1149 = dma.done [#allocation4], 32
    $region37: #{mapping_net_pallas.1} parent=1 // pred_fallthru
      _
    %1150 = vsyncpa [#allocation3], 1
    %1151 = vsyncpa [#allocation4], 1

</llo_original>
